<compile_context>
chip_gen: v6e
topology: v6e:2x2x1
jax: 0.10.0
libtpu: 0.0.40
codegen_flags: <defaults>
</compile_context>

<pallas_src>
import functools

import jax
import jax.numpy as jnp
from jax.experimental import pallas as pl
from jax.experimental.pallas import tpu as pltpu


def _round_up(x, m):
    return ((x + m - 1) // m) * m


def _mse_rowsum_kernel(p_ref, t_ref, o_ref, acc_ref, *, inv_hw):
    # p_ref / t_ref: (TILE_R, TILE_HW) tiles, rows = flattened (n, c) pairs.
    # o_ref:         (TILE_R, 1) per-row spatial mean of squared error.
    # acc_ref:       (TILE_R, 1) f32 running sum (VMEM scratch, resident
    #                across the HW reduction axis).
    k = pl.program_id(1)

    @pl.when(k == 0)
    def _():
        acc_ref[...] = jnp.zeros_like(acc_ref)

    p = p_ref[...].astype(jnp.float32)
    t = t_ref[...].astype(jnp.float32)
    d = p - t
    acc_ref[...] += jnp.sum(d * d, axis=-1, keepdims=True)   # (TILE_R, 1)

    @pl.when(k == pl.num_programs(1) - 1)
    def _():
        # Single multiply by 1/HW in the finalize branch (true HW, not padded).
        o_ref[...] = acc_ref[...] * inv_hw


def _classwise_mse(predict, target, *, tile_r_max=256, tile_hw_max=1024):
    """Per-(n, c) spatial mean of squared error via Pallas."""
    N, C, H, W = predict.shape
    assert target.shape == predict.shape
    R, HW = N * C, H * W

    p2 = predict.reshape(R, HW)
    t2 = target.reshape(R, HW)

    # Row alignment: 8 sublanes for 4-byte dtypes, 16 for 2-byte, 32 for 1-byte.
    itemsize = jnp.dtype(predict.dtype).itemsize
    row_align = max(8, 32 // max(itemsize, 1))

    tile_r = min(tile_r_max, _round_up(R, row_align))
    tile_hw = min(tile_hw_max, _round_up(HW, 128))
    r_pad = _round_up(R, tile_r)
    hw_pad = _round_up(HW, tile_hw)

    if (r_pad, hw_pad) != (R, HW):
        # Zero padding contributes 0 to the squared-error sum (diff == 0).
        p2 = jnp.pad(p2, ((0, r_pad - R), (0, hw_pad - HW)))
        t2 = jnp.pad(t2, ((0, r_pad - R), (0, hw_pad - HW)))

    grid = (r_pad // tile_r, hw_pad // tile_hw)

    # VMEM working set: 2 inputs x 2 buffers x tile_r x tile_hw x itemsize
    # <= 8 MiB at f32 / 256x1024 -- comfortable on v5e/v6e/v7x.
    # TODO(synk): sweep pipeline_mode=pl.Buffered(3) on the input specs for v7x.
    row_means = pl.pallas_call(
        functools.partial(_mse_rowsum_kernel, inv_hw=1.0 / float(HW)),
        out_shape=jax.ShapeDtypeStruct((r_pad, 1), jnp.float32),
        grid_spec=pltpu.PrefetchScalarGridSpec(
            num_scalar_prefetch=0,
            grid=grid,
            in_specs=[
                pl.BlockSpec((tile_r, tile_hw), lambda i, k: (i, k)),
                pl.BlockSpec((tile_r, tile_hw), lambda i, k: (i, k)),
            ],
            out_specs=pl.BlockSpec((tile_r, 1), lambda i, k: (i, 0)),
            scratch_shapes=[pltpu.VMEM((tile_r, 1), jnp.float32)],
        ),
        compiler_params=pltpu.CompilerParams(
            dimension_semantics=("parallel", "arbitrary"),
            vmem_limit_bytes=32 * 1024 * 1024,
        ),
    )(p2, t2)

    return row_means[:R, 0].reshape(N, C)


def mse_loss_pallas(predict, target, *, class_weight=None, loss_weight=1.0,
                    reduction='mean', weight=None, avg_factor=None,
                    reduction_override=None):
    """Matches MSELoss.forward semantics from mmseg."""
    assert reduction_override in (None, 'none', 'mean', 'sum')
    reduction = reduction_override if reduction_override else reduction
    assert reduction in ('none', 'mean', 'sum')

    class_wise_loss = _classwise_mse(predict, target)          # (N, C), f32

    if class_weight is not None:
        cw = jnp.asarray(class_weight, jnp.float32).reshape(1, -1)
        class_wise_loss = class_wise_loss * cw

    # weight_reduce_loss (glue): element-wise weight, then reduce.
    loss = class_wise_loss
    if weight is not None:
        loss = loss * weight
    if avg_factor is None:
        if reduction == 'mean':
            loss = jnp.mean(loss)
        elif reduction == 'sum':
            loss = jnp.sum(loss)
        # 'none': leave as (N, C)
    else:
        if reduction == 'mean':
            loss = jnp.sum(loss) / avg_factor
        elif reduction == 'none':
            pass
        else:
            raise ValueError('avg_factor can not be used with reduction="sum"')
    return loss_weight * loss


def mse_loss_reference(predict, target, *, class_weight=None, loss_weight=1.0,
                       reduction='mean'):
    err = (predict.astype(jnp.float32) - target.astype(jnp.float32)) ** 2
    cls = jnp.mean(err, axis=(2, 3))
    if class_weight is not None:
        cls = cls * jnp.asarray(class_weight, jnp.float32).reshape(1, -1)
    if reduction == 'mean':
        out = jnp.mean(cls)
    elif reduction == 'sum':
        out = jnp.sum(cls)
    else:
        out = cls
    return loss_weight * out


if __name__ == "__main__":
    key = jax.random.PRNGKey(0)
    k1, k2, k3, k4 = jax.random.split(key, 4)

    # Case 1: spec-sized f32, reduction='mean', class weights.
    N, C, H, W = 2, 4, 16, 16
    predict = jax.random.normal(k1, (N, C, H, W), dtype=jnp.float32)
    target = jax.random.normal(k2, (N, C, H, W), dtype=jnp.float32)
    class_weight = [0.5, 1.0, 1.5, 2.0]
    loss = mse_loss_pallas(predict, target, class_weight=class_weight,
                           loss_weight=1.0, reduction='mean')
    loss = jax.block_until_ready(loss)
    ref = mse_loss_reference(predict, target, class_weight=class_weight,
                             loss_weight=1.0, reduction='mean')
    assert jnp.allclose(loss, ref, rtol=1e-5, atol=1e-6), (loss, ref)

    # Case 2: ragged spatial size + bf16 inputs, reduction='none'
    # (exercises zero-padding of both grid axes and the bf16-through-DMA path).
    N2, C2, H2, W2 = 2, 3, 13, 13
    p_bf = jax.random.normal(k3, (N2, C2, H2, W2), dtype=jnp.bfloat16)
    t_bf = jax.random.normal(k4, (N2, C2, H2, W2), dtype=jnp.bfloat16)
    loss2 = mse_loss_pallas(p_bf, t_bf, loss_weight=2.0, reduction='none')
    loss2 = jax.block_until_ready(loss2)
    ref2 = mse_loss_reference(p_bf, t_bf, loss_weight=2.0, reduction='none')
    assert jnp.allclose(loss2, ref2, rtol=1e-4, atol=1e-6), (loss2, ref2)

    print("KERNEL_OK")
</pallas_src>

<mosaic_0001>
module attributes {stable_mosaic.version = 11 : i64} {
  func.func @_mse_rowsum_kernel(%arg0: i32, %arg1: i32, %arg2: memref<8x256xf32, #tpu.memory_space<vmem>>, %arg3: memref<8x256xf32, #tpu.memory_space<vmem>>, %arg4: memref<8x1xf32, #tpu.memory_space<vmem>>, %arg5: memref<8x1xf32, #tpu.memory_space<vmem>>) attributes {dimension_semantics = [#tpu.dimension_semantics<parallel>, #tpu.dimension_semantics<arbitrary>], iteration_bounds = array<i64: 1, 1>, scalar_prefetch = 0 : i64, scratch_operands = 1 : i64, tpu.core_type = #tpu.core_type<tc>, window_params = [{transform_indices = @transform_0, window_bounds = array<i64: 8, 256>}, {transform_indices = @transform_1, window_bounds = array<i64: 8, 256>}, {transform_indices = @transform_2, window_bounds = array<i64: 8, 1>}]} {
    %c0_i32 = arith.constant 0 : i32
    %0 = arith.cmpi eq, %arg1, %c0_i32 : i32
    %1 = arith.extui %0 : i1 to i32
    %c0_i32_0 = arith.constant 0 : i32
    %2 = arith.cmpi ne, %1, %c0_i32_0 : i32
    scf.if %2 {
      %cst_10 = arith.constant 0.000000e+00 : f32
      %15 = vector.broadcast %cst_10 : f32 to vector<8x1xf32>
      %c0_11 = arith.constant 0 : index
      %c0_12 = arith.constant 0 : index
      %16 = vector.load %arg5[%c0_11, %c0_12] : memref<8x1xf32, #tpu.memory_space<vmem>>, vector<8x1xf32>
      tpu.vector_store %arg5[%c0_11, %c0_12], %15 {strides = array<i32>} : memref<8x1xf32, #tpu.memory_space<vmem>>, vector<8x1xf32>,
    } else {
    }
    %c0 = arith.constant 0 : index
    %c0_1 = arith.constant 0 : index
    %3 = vector.load %arg2[%c0, %c0_1] : memref<8x256xf32, #tpu.memory_space<vmem>>, vector<8x256xf32>
    %c0_2 = arith.constant 0 : index
    %c0_3 = arith.constant 0 : index
    %4 = vector.load %arg3[%c0_2, %c0_3] : memref<8x256xf32, #tpu.memory_space<vmem>>, vector<8x256xf32>
    %5 = arith.subf %3, %4 : vector<8x256xf32>
    %c0_4 = arith.constant 0 : index
    %c0_5 = arith.constant 0 : index
    %6 = vector.load %arg5[%c0_4, %c0_5] : memref<8x1xf32, #tpu.memory_space<vmem>>, vector<8x1xf32>
    %7 = arith.mulf %5, %5 : vector<8x256xf32>
    %cst = arith.constant dense<0.000000e+00> : vector<8xf32>
    %8 = vector.multi_reduction <add>, %7, %cst [1] : vector<8x256xf32> to vector<8xf32>
    %9 = vector.shape_cast %8 : vector<8xf32> to vector<8x1xf32>
    %10 = arith.addf %6, %9 : vector<8x1xf32>
    %c0_6 = arith.constant 0 : index
    %c0_7 = arith.constant 0 : index
    %11 = vector.load %arg5[%c0_6, %c0_7] : memref<8x1xf32, #tpu.memory_space<vmem>>, vector<8x1xf32>
    tpu.vector_store %arg5[%c0_6, %c0_7], %10 {strides = array<i32>} : memref<8x1xf32, #tpu.memory_space<vmem>>, vector<8x1xf32>,
    %c0_i32_8 = arith.constant 0 : i32
    %12 = arith.cmpi eq, %arg1, %c0_i32_8 : i32
    %13 = arith.extui %12 : i1 to i32
    %c0_i32_9 = arith.constant 0 : i32
    %14 = arith.cmpi ne, %13, %c0_i32_9 : i32
    scf.if %14 {
      %c0_10 = arith.constant 0 : index
      %c0_11 = arith.constant 0 : index
      %15 = vector.load %arg5[%c0_10, %c0_11] : memref<8x1xf32, #tpu.memory_space<vmem>>, vector<8x1xf32>
      %cst_12 = arith.constant 3.906250e-03 : f32
      %16 = vector.broadcast %cst_12 : f32 to vector<8x1xf32>
      %17 = arith.mulf %15, %16 : vector<8x1xf32>
      %c0_13 = arith.constant 0 : index
      %c0_14 = arith.constant 0 : index
      %18 = vector.load %arg4[%c0_13, %c0_14] : memref<8x1xf32, #tpu.memory_space<vmem>>, vector<8x1xf32>
      tpu.vector_store %arg4[%c0_13, %c0_14], %17 {strides = array<i32>} : memref<8x1xf32, #tpu.memory_space<vmem>>, vector<8x1xf32>,
    } else {
    }
    return
  }
  func.func @transform_0(%arg0: i32, %arg1: i32) -> (i32, i32) {
    %c0_i32 = arith.constant 0 : i32
    return %arg0, %arg1 : i32, i32
  }
  func.func @transform_1(%arg0: i32, %arg1: i32) -> (i32, i32) {
    %c0_i32 = arith.constant 0 : i32
    return %arg0, %arg1 : i32, i32
  }
  func.func @transform_2(%arg0: i32, %arg1: i32) -> (i32, i32) {
    %c0_i32 = arith.constant 0 : i32
    %c0_i32_0 = arith.constant 0 : i32
    return %arg0, %c0_i32 : i32, i32
  }
}

</mosaic_0001>

<llo_original>
// kernel: tpu_custom_call.1
$region0: #{tpu_custom_call.1}
  #allocation0 [shape = 'u32[]', space=smem, size = 0x4, offset = 0x4, fixed_abs, tag = 'smem constant byte address 0x4 - core index']
  #allocation1 [shape = 'u32[144,128]{1,0:T(1,128)}', space=vmem, size = 0x12000, scoped, tag = 'internal scratch']
  #allocation2 [shape = 'f32[8,1]{1,0:T(8,128)}', space=vmem, size = 0x1000, scoped, tag = 'scratch operand']
  %s0 = inlined_call_operand.hbm [shape: f32[8,256], index: 0, kind: input, shape index: {}]
  %s1 = inlined_call_operand.hbm [shape: f32[8,256], index: 1, kind: input, shape index: {}]
  %s2 = inlined_call_operand.vmem [shape: f32[8,1], index: 2, kind: output, shape index: {}]
  %s3 = sld [smem:[#allocation0]]
  $region34: #{tpu_custom_call.1} parent=0
    _
  %s5 = ssub.s32 1, %s3
  %s6 = scalar_select 0, %s5, %s3
  $region1: #{tpu_custom_call.1} parent=0
    #allocation3 [shape = 'u8[8192]{0}', space=vmem, size = 0x2000, scoped, tag = 'input window, operand 0, single buffered']
    #allocation4 [shape = 's32[1]{0}', space=sflag, size = 0x4, scoped, tag = 'scoped memory for tpu_custom_call.1']
    #allocation5 [shape = 'u8[8192]{0}', space=vmem, size = 0x2000, scoped, tag = 'input window, operand 1, single buffered']
    #allocation6 [shape = 's32[1]{0}', space=sflag, size = 0x4, scoped, tag = 'scoped memory for tpu_custom_call.1']
    %7 = vsyncpa [#allocation4], 0
    %8 = vsyncpa [#allocation6], 0
    // Predicated region
    $region2: #{tpu_custom_call.1} parent=1 // pred_check
      _
    $region3: #{tpu_custom_call.1} parent=1 // pred_check_branch
      %10 = sbr.rel (0) target = $region5
    $region4: #{tpu_custom_call.1} parent=1 // pred_region
      %s12 = ssub.s32 256, 256
      %13 = vsyncadd [#allocation4], %s12
      %s15 = sshll.u32 [#allocation3], 4
      %s16 = int_to_ptr.vmem [resolvable:$true] %s15
      %18 = dma.hbm_to_vmem [thread:$0]  %s0, 256, %s16, [#allocation4]
    $region5: #{tpu_custom_call.1} parent=1 // pred_fallthru
      _
    // Predicated region
    $region6: #{tpu_custom_call.1} parent=1 // pred_check
      _
    $region7: #{tpu_custom_call.1} parent=1 // pred_check_branch
      %20 = sbr.rel (0) target = $region9
    $region8: #{tpu_custom_call.1} parent=1 // pred_region
      %s22 = ssub.s32 256, 256
      %23 = vsyncadd [#allocation6], %s22
      %s25 = sshll.u32 [#allocation5], 4
      %s26 = int_to_ptr.vmem [resolvable:$true] %s25
      %28 = dma.hbm_to_vmem [thread:$0]  %s1, 256, %s26, [#allocation6]
    $region9: #{tpu_custom_call.1} parent=1 // pred_fallthru
      _
    // Predicated region
    $region10: #{tpu_custom_call.1} parent=1 // pred_check
      _
    $region11: #{tpu_custom_call.1} parent=1 // pred_check_branch
      %30 = sbr.rel (0) target = $region13
    $region12: #{tpu_custom_call.1} parent=1 // pred_region
      %31 = dma.done [#allocation4], 256
    $region13: #{tpu_custom_call.1} parent=1 // pred_fallthru
      _
    // Predicated region
    $region14: #{tpu_custom_call.1} parent=1 // pred_check
      _
    $region15: #{tpu_custom_call.1} parent=1 // pred_check_branch
      %33 = sbr.rel (0) target = $region17
    $region16: #{tpu_custom_call.1} parent=1 // pred_region
      %34 = dma.done [#allocation6], 256
    $region17: #{tpu_custom_call.1} parent=1 // pred_fallthru
      _
    %p35 = scmp.eq.s32.totalorder 0, 0
    // Predicated region
    $region18: #{tpu_custom_call.1} parent=1 // pred_check
      %p36 = pneg %p35
    $region19: #{tpu_custom_call.1} parent=1 // pred_check_branch
      %38 = sbr.rel (%p36) target = $region21
    $region20: #{tpu_custom_call.1} parent=1 // pred_region
      %vm39 = vcmask 7168
      %40 = vst.msk [vmem:[#allocation2] sm:$0xff] %vm39, 0.0
    $region21: #{tpu_custom_call.1} parent=1 // pred_fallthru
      _
    %v41 = vld [vmem:[#allocation3] sm:$0xff]
    %v42 = vld [vmem:[#allocation3 + $0x8] sm:$0xff]
    %v43 = vld [vmem:[#allocation5] sm:$0xff]
    %v44 = vld [vmem:[#allocation5 + $0x8] sm:$0xff]
    %v45 = vsub.f32 %v41, %v43
    %v46 = vsub.f32 %v42, %v44
    %v47 = vld [vmem:[#allocation2] sm:$0xff]
    %v48 = vmul.f32 %v45, %v45
    %v49 = vmul.f32 %v46, %v46
    %v50 = vadd.f32 %v48, %v49
    %51 = vadd.xlane.f32.xlu0 %v50
    %v52 = vpop.xlane.xlu0 %51
    %v53 = vadd.f32 %v47, %v52
    %vm54 = vcmask 7168
    %55 = vst.msk [vmem:[#allocation2] sm:$0xff] %vm54, %v53
    // Predicated region
    $region22: #{tpu_custom_call.1} parent=1 // pred_check
      %p56 = pneg %p35
    $region23: #{tpu_custom_call.1} parent=1 // pred_check_branch
      %58 = sbr.rel (%p56) target = $region25
    $region24: #{tpu_custom_call.1} parent=1 // pred_region
      %v59 = vld [vmem:[#allocation2] sm:$0xff]
      %v60 = vmul.f32 %v59, 0.00390625
      %61 = vst.msk [vmem:[%s2] sm:$0xff] %vm54, %v60
    $region25: #{tpu_custom_call.1} parent=1 // pred_fallthru
      _
    // Predicated region
    $region26: #{tpu_custom_call.1} parent=1 // pred_check
      _
    $region27: #{tpu_custom_call.1} parent=1 // pred_check_branch
      %63 = sbr.rel (0) target = $region29
    $region28: #{tpu_custom_call.1} parent=1 // pred_region
      _
    $region29: #{tpu_custom_call.1} parent=1 // pred_fallthru
      _
    // Predicated region
    $region30: #{tpu_custom_call.1} parent=1 // pred_check
      _
    $region31: #{tpu_custom_call.1} parent=1 // pred_check_branch
      %65 = sbr.rel (0) target = $region33
    $region32: #{tpu_custom_call.1} parent=1 // pred_region
      _
    $region33: #{tpu_custom_call.1} parent=1 // pred_fallthru
      _
    %66 = vsyncpa [#allocation4], 1
    %67 = vsyncpa [#allocation6], 1

</llo_original>
